<compile_context>
chip_gen: v6e
topology: v6e:2x2x1
jax: 0.10.0
libtpu: 0.0.40
codegen_flags: <defaults>
</compile_context>

<pallas_src>
import jax
import jax.numpy as jnp
from jax.experimental import pallas as pl
from jax.experimental.pallas import tpu as pltpu

# ---- cfg constants (stand-ins for Config.from_yaml values) ------------------------------
LOG_MEAN = -8.0          # cfg.data.log_mean
LOG_VAR = 2.5            # cfg.data.log_var
SIGMA_DATA = 0.5         # cfg.model_sigma.sigma_data (EDM preconditioning)
P_MEAN = -1.2            # lognormal sample density loc
P_STD = 1.2              # lognormal sample density scale

# torch.cdist returns float32; set to jnp.bfloat16 (esp. on v5e) to halve the dominant
# (B,N,N) HBM writeback IF the Hungarian assignment tolerates bf16 distances.
DIST_DTYPE = jnp.float32


# ================================ fused kernel ============================================

def _fused_kernel(x_ref, pm_ref, noise_ref, sigma_ref, elog_ref, dist_ref, loss_ref):
    """Per grid step: a block of Bt events, channels-first (Bt, C, N)."""
    Bt, C, N = x_ref.shape
    x = x_ref[...]                                   # (Bt, C, N)
    pm = pm_ref[...]                                 # (Bt, 1, N)  1.0 = padded point
    noise = noise_ref[...]                           # (Bt, C, N)
    sigma = sigma_ref[...]                           # (Bt, 1, 1)
    valid = 1.0 - pm                                 # 1.0 = real point

    # --- preprocess: zero padded energies, log-normalise ONLY the energy channel ---------
    e = x[:, 3:4, :] * valid                         # (Bt, 1, N)
    e_log = (jnp.log(e + 1e-20) - LOG_MEAN) / LOG_VAR
    elog_ref[...] = e_log                            # energy-channel-only writeback

    ch = jax.lax.broadcasted_iota(jnp.int32, (Bt, C, N), 1)
    x_prep = jnp.where(ch == C - 1, e_log, x)        # full x_prep stays in-register

    # --- pairwise euclidean distances (torch.cdist(x_prep, noise)) ------------------------
    # d2[b,i,j] = ||x_i||^2 + ||n_j||^2 - 2 x_i.n_j ; cross term on the MXU, norms on the VPU.
    xn = jax.lax.dot_general(
        x_prep, noise,
        dimension_numbers=(((1,), (1,)), ((0,), (0,))),
        preferred_element_type=jnp.float32)          # (Bt, N, N)
    x2 = jnp.swapaxes(jnp.sum(x_prep * x_prep, axis=1, keepdims=True), 1, 2)  # (Bt, N, 1)
    n2 = jnp.sum(noise * noise, axis=1, keepdims=True)                        # (Bt, 1, N)
    d2 = jnp.maximum(x2 + n2 - 2.0 * xn, 0.0)
    dist_ref[...] = jnp.sqrt(d2).astype(dist_ref.dtype)

    # --- EDM (k-diffusion) loss, masked over real points ---------------------------------
    var = sigma * sigma + SIGMA_DATA * SIGMA_DATA            # (Bt,1,1)
    c_skip = (SIGMA_DATA * SIGMA_DATA) / var
    c_out = sigma * SIGMA_DATA * jax.lax.rsqrt(var)
    inv_c_out = 1.0 / c_out                                   # per-event scalar reciprocal
    noised = x_prep + noise * sigma
    target = (x_prep - c_skip * noised) * inv_c_out
    # TODO(synk): real loss is (denoiser(noised*c_in, sigma, cond) - target)^2; the external
    # CaloClouds2_Attention denoiser output is taken as zeros -> loss = masked mean(target^2).
    sq = target * target * valid                              # mask broadcasts over channels
    n_valid = jnp.sum(valid, axis=(1, 2), keepdims=True)      # (Bt,1,1)
    inv_norm = 1.0 / (float(C) * jnp.maximum(n_valid, 1.0))
    loss_ref[...] = jnp.sum(sq, axis=(1, 2), keepdims=True) * inv_norm


# ================================ wrapper ==================================================

def _pick_block_events(B):
    """Events per grid step: fill sublanes (Bt*C >= 8) but keep >=2 grid steps when possible."""
    for bt in (8, 4, 2):
        if B % bt == 0 and B // bt >= 2:
            return bt
    return 1


@jax.jit
def _fused_forward(x_cf, pm_f, noise_cf, sigma3d):
    B, C, N = x_cf.shape
    Bt = _pick_block_events(B)

    out_shape = (
        jax.ShapeDtypeStruct((B, 1, N), jnp.float32),   # log-normalised energy channel
        jax.ShapeDtypeStruct((B, N, N), DIST_DTYPE),    # cdist matrix
        jax.ShapeDtypeStruct((B, 1, 1), jnp.float32),   # per-event loss
    )
    in_specs = [
        pl.BlockSpec((Bt, C, N), lambda b: (b, 0, 0)),
        pl.BlockSpec((Bt, 1, N), lambda b: (b, 0, 0)),
        pl.BlockSpec((Bt, C, N), lambda b: (b, 0, 0)),
        pl.BlockSpec((Bt, 1, 1), lambda b: (b, 0, 0)),
    ]
    out_specs = (
        pl.BlockSpec((Bt, 1, N), lambda b: (b, 0, 0)),
        pl.BlockSpec((Bt, N, N), lambda b: (b, 0, 0)),
        pl.BlockSpec((Bt, 1, 1), lambda b: (b, 0, 0)),
    )

    # double-buffered block footprint (f32), with headroom; capped for v7x's 64 MiB VMEM
    step_bytes = 4 * Bt * (2 * C * N + 2 * N + N * N + 2)
    vmem_limit = int(min(max(4 * step_bytes, 32 * 2**20), 64 * 2**20))

    return pl.pallas_call(
        _fused_kernel,
        out_shape=out_shape,
        grid=(B // Bt,),
        in_specs=in_specs,
        out_specs=out_specs,
        compiler_params=pltpu.CompilerParams(
            dimension_semantics=("parallel",),
            vmem_limit_bytes=vmem_limit),
    )(x_cf, pm_f, noise_cf, sigma3d)


def train_forward(x, pm, e, points_per_layer, key):
    """Data-prep + noise/sigma + OT-distance + diffusion-loss compute of Train.forward
    (optimizer / EMA / scheduler / DDP / logging are host-side training glue and omitted).

    x:  (B, N, 4) point cloud  [x, y, z, energy]   (PyTorch layout)
    pm: (B, N) bool padding mask (True = padded)
    e:  (B, 1) incident energy
    points_per_layer: (B, L)
    """
    B, N, C = x.shape

    # --- load_data_per_loop conditioning features (tiny, stays in XLA) --------------------
    e_norm = e / 100.0 * 2.0 - 1.0                                # cfg.data.norm_cond
    cond_feats = jnp.concatenate([e_norm, points_per_layer], -1)  # (B, 1+L)

    x_cf = jnp.transpose(x, (0, 2, 1)).astype(jnp.float32)        # (B, 4, N) channels-first
    pm_f = pm.astype(jnp.float32)[:, None, :]                     # (B, 1, N)

    # noise = randn_like(x); sigma ~ lognormal(P_MEAN, P_STD) sample density.
    # Drawn with jax.random (the in-kernel hardware PRNG has no CPU/interpret lowering).
    k_noise, k_sigma = jax.random.split(key)
    noise_cf = jax.random.normal(k_noise, (B, C, N), jnp.float32)
    sigma3d = jnp.exp(P_MEAN + P_STD * jax.random.normal(k_sigma, (B, 1, 1), jnp.float32))

    e_log_cf, dist_matrix, loss_pe = _fused_forward(x_cf, pm_f, noise_cf, sigma3d)

    # TODO(synk): scipy.optimize.linear_sum_assignment over dist_matrix (Hungarian / OT
    # reordering of the noise) is a sequential host-side algorithm with no Pallas equivalent.

    loss = jnp.mean(loss_pe)
    # channels 0-2 are untouched by the preprocessing, so only the energy channel comes back
    # from the kernel; reassemble the (B, N, 4) x_prep that callers expect.
    x_prep = jnp.concatenate(
        [x[..., :3].astype(jnp.float32), jnp.transpose(e_log_cf, (0, 2, 1))], axis=-1)
    return loss, cond_feats, dist_matrix, x_prep


# ================================ demo =====================================================

if __name__ == "__main__":
    B, N, C, L = 2, 128, 4, 48

    key = jax.random.PRNGKey(0)
    kx, ke, kp, kfwd = jax.random.split(key, 4)

    # deterministic synthetic inputs consistent with the data loader
    xyz = jax.random.uniform(kx, (B, N, 3), jnp.float32, minval=-1.0, maxval=1.0)
    energy = jax.random.uniform(ke, (B, N, 1), jnp.float32, minval=0.0, maxval=10.0)
    x = jnp.concatenate([xyz, energy], axis=-1)                   # (B, N, 4)

    pm = jnp.arange(N)[None, :] >= jnp.array([N - 16, N - 32])[:, None]   # (B, N) padding
    e = jax.random.uniform(ke, (B, 1), jnp.float32, minval=10.0, maxval=90.0)
    points_per_layer = jax.random.uniform(kp, (B, L), jnp.float32)

    loss, cond_feats, dist_matrix, x_prep = train_forward(x, pm, e, points_per_layer, kfwd)
    jax.block_until_ready((loss, cond_feats, dist_matrix, x_prep))

    # shape / sanity checks
    assert loss.shape == ()
    assert cond_feats.shape == (B, 1 + L)
    assert dist_matrix.shape == (B, N, N)
    assert x_prep.shape == (B, N, C)
    assert bool(jnp.isfinite(loss))
    assert bool(jnp.all(jnp.isfinite(dist_matrix)))
    assert bool(jnp.all(dist_matrix >= 0.0))

    # preprocessing correctness vs a pure-JAX reference (RNG-independent)
    e_masked = jnp.where(pm, 0.0, x[..., 3])
    e_ref = (jnp.log(e_masked + 1e-20) - LOG_MEAN) / LOG_VAR
    x_prep_ref = jnp.concatenate([x[..., :3], e_ref[..., None]], axis=-1)
    assert bool(jnp.allclose(x_prep, x_prep_ref, atol=1e-5, rtol=1e-5))

    print("KERNEL_OK")
</pallas_src>

<mosaic_0001>
module attributes {stable_mosaic.version = 11 : i64} {
  func.func @_fused_kernel(%arg0: i32, %arg1: memref<1x4x128xf32, #tpu.memory_space<vmem>>, %arg2: memref<1x1x128xf32, #tpu.memory_space<vmem>>, %arg3: memref<1x4x128xf32, #tpu.memory_space<vmem>>, %arg4: memref<1x1x1xf32, #tpu.memory_space<vmem>>, %arg5: memref<1x1x128xf32, #tpu.memory_space<vmem>>, %arg6: memref<1x128x128xf32, #tpu.memory_space<vmem>>, %arg7: memref<1x1x1xf32, #tpu.memory_space<vmem>>) attributes {dimension_semantics = [#tpu.dimension_semantics<parallel>], iteration_bounds = array<i64: 2>, scalar_prefetch = 0 : i64, scratch_operands = 0 : i64, tpu.core_type = #tpu.core_type<tc>, window_params = [{transform_indices = @transform_0, window_bounds = array<i64: 1, 4, 128>}, {transform_indices = @transform_1, window_bounds = array<i64: 1, 1, 128>}, {transform_indices = @transform_2, window_bounds = array<i64: 1, 4, 128>}, {transform_indices = @transform_3, window_bounds = array<i64: 1, 1, 1>}, {transform_indices = @transform_4, window_bounds = array<i64: 1, 1, 128>}, {transform_indices = @transform_5, window_bounds = array<i64: 1, 128, 128>}, {transform_indices = @transform_6, window_bounds = array<i64: 1, 1, 1>}]} {
    %c0 = arith.constant 0 : index
    %c0_0 = arith.constant 0 : index
    %c0_1 = arith.constant 0 : index
    %0 = vector.load %arg1[%c0, %c0_0, %c0_1] : memref<1x4x128xf32, #tpu.memory_space<vmem>>, vector<1x4x128xf32>
    %c0_2 = arith.constant 0 : index
    %c0_3 = arith.constant 0 : index
    %c0_4 = arith.constant 0 : index
    %1 = vector.load %arg2[%c0_2, %c0_3, %c0_4] : memref<1x1x128xf32, #tpu.memory_space<vmem>>, vector<1x1x128xf32>
    %c0_5 = arith.constant 0 : index
    %c0_6 = arith.constant 0 : index
    %c0_7 = arith.constant 0 : index
    %2 = vector.load %arg3[%c0_5, %c0_6, %c0_7] : memref<1x4x128xf32, #tpu.memory_space<vmem>>, vector<1x4x128xf32>
    %c0_8 = arith.constant 0 : index
    %c0_9 = arith.constant 0 : index
    %c0_10 = arith.constant 0 : index
    %3 = vector.load %arg4[%c0_8, %c0_9, %c0_10] : memref<1x1x1xf32, #tpu.memory_space<vmem>>, vector<1x1x1xf32>
    %cst = arith.constant 1.000000e+00 : f32
    %4 = vector.broadcast %cst : f32 to vector<1x1x128xf32>
    %5 = arith.subf %4, %1 : vector<1x1x128xf32>
    %6 = vector.extract_strided_slice %0 {offsets = [0, 3, 0], sizes = [1, 1, 128], strides = [1, 1, 1]} : vector<1x4x128xf32> to vector<1x1x128xf32>
    %7 = arith.mulf %6, %5 : vector<1x1x128xf32>
    %cst_11 = arith.constant 9.99999968E-21 : f32
    %8 = vector.broadcast %cst_11 : f32 to vector<1x1x128xf32>
    %9 = arith.addf %7, %8 : vector<1x1x128xf32>
    %10 = math.log %9 : vector<1x1x128xf32>
    %cst_12 = arith.constant -8.000000e+00 : f32
    %11 = vector.broadcast %cst_12 : f32 to vector<1x1x128xf32>
    %12 = arith.subf %10, %11 : vector<1x1x128xf32>
    %cst_13 = arith.constant 2.500000e+00 : f32
    %13 = vector.broadcast %cst_13 : f32 to vector<1x1x128xf32>
    %14 = arith.divf %12, %13 : vector<1x1x128xf32>
    %c0_14 = arith.constant 0 : index
    %c0_15 = arith.constant 0 : index
    %c0_16 = arith.constant 0 : index
    %15 = vector.load %arg5[%c0_14, %c0_15, %c0_16] : memref<1x1x128xf32, #tpu.memory_space<vmem>>, vector<1x1x128xf32>
    tpu.vector_store %arg5[%c0_14, %c0_15, %c0_16], %14 {strides = array<i32>} : memref<1x1x128xf32, #tpu.memory_space<vmem>>, vector<1x1x128xf32>,
    %16 = tpu.iota {dimensions = array<i32: 1>} : vector<1x4x128xi32>
    %c3_i32 = arith.constant 3 : i32
    %17 = vector.broadcast %c3_i32 : i32 to vector<1x4x128xi32>
    %18 = arith.cmpi eq, %16, %17 : vector<1x4x128xi32>
    %19 = vector.shape_cast %14 : vector<1x1x128xf32> to vector<1x1x128xf32>
    %20 = vector.broadcast %19 : vector<1x1x128xf32> to vector<1x4x128xf32>
    %21 = arith.select %18, %20, %0 : vector<1x4x128xi1>, vector<1x4x128xf32>
    %cst_17 = arith.constant dense<0.000000e+00> : vector<1x128x128xf32>
    %22 = tpu.matmul %21, %2, %cst_17 {dimension_numbers = #tpu.dot_dimension_numbers<[1], [1], [2], [2], [0, 0, 0, 2, 1, 2], [0], [0]>} : vector<1x4x128xf32>, vector<1x4x128xf32>, vector<1x128x128xf32> -> vector<1x128x128xf32>
    %23 = arith.mulf %21, %21 : vector<1x4x128xf32>
    %cst_18 = arith.constant dense<0.000000e+00> : vector<1x128xf32>
    %24 = vector.multi_reduction <add>, %23, %cst_18 [1] : vector<1x4x128xf32> to vector<1x128xf32>
    %25 = vector.shape_cast %24 : vector<1x128xf32> to vector<1x1x128xf32>
    %26 = tpu.transpose %25, [0, 2, 1] : vector<1x1x128xf32> -> vector<1x128x1xf32>
    %27 = arith.mulf %2, %2 : vector<1x4x128xf32>
    %cst_19 = arith.constant dense<0.000000e+00> : vector<1x128xf32>
    %28 = vector.multi_reduction <add>, %27, %cst_19 [1] : vector<1x4x128xf32> to vector<1x128xf32>
    %29 = vector.shape_cast %28 : vector<1x128xf32> to vector<1x1x128xf32>
    %30 = vector.broadcast %26 : vector<1x128x1xf32> to vector<1x128x128xf32>
    %31 = vector.broadcast %29 : vector<1x1x128xf32> to vector<1x128x128xf32>
    %32 = arith.addf %30, %31 : vector<1x128x128xf32>
    %cst_20 = arith.constant 2.000000e+00 : f32
    %33 = vector.broadcast %cst_20 : f32 to vector<1x128x128xf32>
    %34 = arith.mulf %33, %22 : vector<1x128x128xf32>
    %35 = arith.subf %32, %34 : vector<1x128x128xf32>
    %cst_21 = arith.constant 0.000000e+00 : f32
    %36 = vector.broadcast %cst_21 : f32 to vector<1x128x128xf32>
    %37 = arith.maximumf %35, %36 : vector<1x128x128xf32>
    %38 = math.sqrt %37 : vector<1x128x128xf32>
    %c0_22 = arith.constant 0 : index
    %c0_23 = arith.constant 0 : index
    %c0_24 = arith.constant 0 : index
    %39 = vector.load %arg6[%c0_22, %c0_23, %c0_24] : memref<1x128x128xf32, #tpu.memory_space<vmem>>, vector<1x128x128xf32>
    tpu.vector_store %arg6[%c0_22, %c0_23, %c0_24], %38 {strides = array<i32>} : memref<1x128x128xf32, #tpu.memory_space<vmem>>, vector<1x128x128xf32>,
    %40 = arith.mulf %3, %3 : vector<1x1x1xf32>
    %cst_25 = arith.constant 2.500000e-01 : f32
    %41 = vector.broadcast %cst_25 : f32 to vector<1x1x1xf32>
    %42 = arith.addf %40, %41 : vector<1x1x1xf32>
    %cst_26 = arith.constant 2.500000e-01 : f32
    %43 = vector.broadcast %cst_26 : f32 to vector<1x1x1xf32>
    %44 = arith.divf %43, %42 : vector<1x1x1xf32>
    %cst_27 = arith.constant 5.000000e-01 : f32
    %45 = vector.broadcast %cst_27 : f32 to vector<1x1x1xf32>
    %46 = arith.mulf %3, %45 : vector<1x1x1xf32>
    %47 = math.rsqrt %42 : vector<1x1x1xf32>
    %48 = arith.mulf %46, %47 : vector<1x1x1xf32>
    %cst_28 = arith.constant 1.000000e+00 : f32
    %49 = vector.broadcast %cst_28 : f32 to vector<1x1x1xf32>
    %50 = arith.divf %49, %48 : vector<1x1x1xf32>
    %51 = vector.broadcast %3 : vector<1x1x1xf32> to vector<1x4x128xf32>
    %52 = arith.mulf %2, %51 : vector<1x4x128xf32>
    %53 = arith.addf %21, %52 : vector<1x4x128xf32>
    %54 = vector.broadcast %44 : vector<1x1x1xf32> to vector<1x4x128xf32>
    %55 = arith.mulf %54, %53 : vector<1x4x128xf32>
    %56 = arith.subf %21, %55 : vector<1x4x128xf32>
    %57 = vector.broadcast %50 : vector<1x1x1xf32> to vector<1x4x128xf32>
    %58 = arith.mulf %56, %57 : vector<1x4x128xf32>
    %59 = arith.mulf %58, %58 : vector<1x4x128xf32>
    %60 = vector.broadcast %5 : vector<1x1x128xf32> to vector<1x4x128xf32>
    %61 = arith.mulf %59, %60 : vector<1x4x128xf32>
    %cst_29 = arith.constant dense<0.000000e+00> : vector<1xf32>
    %62 = vector.multi_reduction <add>, %5, %cst_29 [1, 2] : vector<1x1x128xf32> to vector<1xf32>
    %63 = vector.shape_cast %62 : vector<1xf32> to vector<1x1x1xf32>
    %cst_30 = arith.constant 1.000000e+00 : f32
    %64 = vector.broadcast %cst_30 : f32 to vector<1x1x1xf32>
    %65 = arith.maximumf %63, %64 : vector<1x1x1xf32>
    %cst_31 = arith.constant 4.000000e+00 : f32
    %66 = vector.broadcast %cst_31 : f32 to vector<1x1x1xf32>
    %67 = arith.mulf %66, %65 : vector<1x1x1xf32>
    %cst_32 = arith.constant 1.000000e+00 : f32
    %68 = vector.broadcast %cst_32 : f32 to vector<1x1x1xf32>
    %69 = arith.divf %68, %67 : vector<1x1x1xf32>
    %cst_33 = arith.constant dense<0.000000e+00> : vector<1xf32>
    %70 = vector.multi_reduction <add>, %61, %cst_33 [1, 2] : vector<1x4x128xf32> to vector<1xf32>
    %71 = vector.shape_cast %70 : vector<1xf32> to vector<1x1x1xf32>
    %72 = arith.mulf %71, %69 : vector<1x1x1xf32>
    %c0_34 = arith.constant 0 : index
    %c0_35 = arith.constant 0 : index
    %c0_36 = arith.constant 0 : index
    %73 = vector.load %arg7[%c0_34, %c0_35, %c0_36] : memref<1x1x1xf32, #tpu.memory_space<vmem>>, vector<1x1x1xf32>
    tpu.vector_store %arg7[%c0_34, %c0_35, %c0_36], %72 {strides = array<i32>} : memref<1x1x1xf32, #tpu.memory_space<vmem>>, vector<1x1x1xf32>,
    return
  }
  func.func @transform_0(%arg0: i32) -> (i32, i32, i32) {
    %c0_i32 = arith.constant 0 : i32
    %c0_i32_0 = arith.constant 0 : i32
    %c0_i32_1 = arith.constant 0 : i32
    return %arg0, %c0_i32, %c0_i32_0 : i32, i32, i32
  }
  func.func @transform_1(%arg0: i32) -> (i32, i32, i32) {
    %c0_i32 = arith.constant 0 : i32
    %c0_i32_0 = arith.constant 0 : i32
    %c0_i32_1 = arith.constant 0 : i32
    return %arg0, %c0_i32, %c0_i32_0 : i32, i32, i32
  }
  func.func @transform_2(%arg0: i32) -> (i32, i32, i32) {
    %c0_i32 = arith.constant 0 : i32
    %c0_i32_0 = arith.constant 0 : i32
    %c0_i32_1 = arith.constant 0 : i32
    return %arg0, %c0_i32, %c0_i32_0 : i32, i32, i32
  }
  func.func @transform_3(%arg0: i32) -> (i32, i32, i32) {
    %c0_i32 = arith.constant 0 : i32
    %c0_i32_0 = arith.constant 0 : i32
    %c0_i32_1 = arith.constant 0 : i32
    return %arg0, %c0_i32, %c0_i32_0 : i32, i32, i32
  }
  func.func @transform_4(%arg0: i32) -> (i32, i32, i32) {
    %c0_i32 = arith.constant 0 : i32
    %c0_i32_0 = arith.constant 0 : i32
    %c0_i32_1 = arith.constant 0 : i32
    return %arg0, %c0_i32, %c0_i32_0 : i32, i32, i32
  }
  func.func @transform_5(%arg0: i32) -> (i32, i32, i32) {
    %c0_i32 = arith.constant 0 : i32
    %c0_i32_0 = arith.constant 0 : i32
    %c0_i32_1 = arith.constant 0 : i32
    return %arg0, %c0_i32, %c0_i32_0 : i32, i32, i32
  }
  func.func @transform_6(%arg0: i32) -> (i32, i32, i32) {
    %c0_i32 = arith.constant 0 : i32
    %c0_i32_0 = arith.constant 0 : i32
    %c0_i32_1 = arith.constant 0 : i32
    return %arg0, %c0_i32, %c0_i32_0 : i32, i32, i32
  }
}

</mosaic_0001>

<llo_original>
// kernel: _fused_forward.1
$region0: #{_fused_forward.1}
  #allocation0 [shape = 'u32[]', space=smem, size = 0x4, offset = 0x4, fixed_abs, tag = 'smem constant byte address 0x4 - core index']
  #allocation1 [shape = 'u32[144,128]{1,0:T(1,128)}', space=vmem, size = 0x12000, scoped, tag = 'internal scratch']
  %s0 = inlined_call_operand.hbm [shape: f32[2,4,128], index: 0, kind: input, shape index: {}]
  %s1 = inlined_call_operand.vmem [shape: f32[2,1,128], index: 1, kind: input, shape index: {}]
  %s2 = inlined_call_operand.hbm [shape: f32[2,4,128], index: 2, kind: input, shape index: {}]
  %s3 = inlined_call_operand.vmem [shape: f32[2,1,1], index: 3, kind: input, shape index: {}]
  %s4 = inlined_call_operand.hbm [shape: f32[2,1,128], index: 4, kind: output, shape index: {0}]
  %s5 = inlined_call_operand.hbm [shape: f32[2,128,128], index: 5, kind: output, shape index: {1}]
  %s6 = inlined_call_operand.vmem [shape: f32[2,1,1], index: 6, kind: output, shape index: {2}]
  %7 = xla_tuple %s4, %s5, %s6
  %s8 = sld [smem:[#allocation0]]
  $region73: #{_fused_forward.1} parent=0
    _
  %s10 = ssub.s32 1, %s8
  %s11 = scalar_select 0, %s10, %s8
  $region1: #{_fused_forward.1} parent=0
    #allocation2 [shape = 'u8[4096]{0}', space=vmem, size = 0x1000, scoped, tag = 'input window, operand 0']
    #allocation3 [shape = 's32[2]{0}', space=sflag, size = 0x8, scoped, tag = 'scoped memory for _fused_forward.1']
    #allocation4 [shape = 's32[2]{0}', space=sflag, size = 0x8, scoped, tag = 'scoped memory for _fused_forward.1']
    #allocation5 [shape = 'u8[4096]{0}', space=vmem, size = 0x1000, scoped, tag = 'input window, operand 2']
    #allocation6 [shape = 's32[2]{0}', space=sflag, size = 0x8, scoped, tag = 'scoped memory for _fused_forward.1']
    #allocation7 [shape = 'u8[1024]{0}', space=vmem, size = 0x400, scoped, tag = 'output window, operand 0']
    #allocation8 [shape = 'u8[131072]{0}', space=vmem, size = 0x20000, scoped, tag = 'output window, operand 1']
    #allocation9 [shape = 's32[2]{0}', space=sflag, size = 0x8, scoped, tag = 'scoped memory for _fused_forward.1']
    %12 = vsyncpa [#allocation3], 0
    %s13 = scalar_lea.sflag [#allocation3], 1
    %14 = vsyncpa %s13, 0
    %15 = vsyncpa [#allocation6], 0
    %s16 = scalar_lea.sflag [#allocation6], 1
    %17 = vsyncpa %s16, 0
    %18 = vsyncpa [#allocation4], 0
    %s19 = scalar_lea.sflag [#allocation4], 1
    %20 = vsyncpa %s19, 0
    %21 = vsyncpa [#allocation9], 0
    %s22 = scalar_lea.sflag [#allocation9], 1
    %23 = vsyncpa %s22, 0
    loop: start=0, step=1, limit=4
    $region2: #{_fused_forward.1} parent=1 // loop_pre_header
      _
    $region3: #{_fused_forward.1} parent=1 // loop_header
      %s25 = sphi 0, %s29
      %p26 = scmp.ge.s32.totalorder %s25, 4
      %s35 = sphi 0, %s37
      %s38 = sphi 0, %s35
      %s39 = sphi 0, %s38
      %s55 = sphi 0, %s39
      %s61 = sphi 0, %s63
      %s64 = sphi 0, %s61
      %s65 = sphi 0, %s64
      %s81 = sphi 0, %s65
      %s87 = sphi 0, %s89
      %s90 = sphi 0, %s87
      %s91 = sphi 0, %s90
      %s107 = sphi 0, %s91
      %s113 = sphi 0, %s115
      %s116 = sphi 0, %s113
      %s117 = sphi 0, %s116
      %s133 = sphi 0, %s117
      %s139 = sphi 0, %s141
      %s142 = sphi 0, %s139
      %s143 = sphi 0, %s142
      %s159 = sphi 0, %s143
      %s165 = sphi 0, %s167
      %s168 = sphi 0, %s165
      %s169 = sphi 0, %s168
      %s185 = sphi 0, %s169
      %s191 = sphi 0, %s193
      %s194 = sphi 0, %s191
      %s195 = sphi 0, %s194
      %s211 = sphi 0, %s195
    $region4: #{_fused_forward.1} parent=1 // loop_header_branch
      %28 = sbr.rel (%p26) target = $region8
    $region5: #{_fused_forward.1} parent=1 // loop_body
      %s30 = ssub.s32 %s25, 1
      %s31 = ssub.s32 %s25, 2
      %s32 = sadd.s32 %s25, 1
      %s33 = ssub.s32 %s25, %s32
      %p34 = scmp.eq.s32.totalorder %s33, 0
      %s36 = sadd.s32 %s35, 1
      %s37 = scalar_select %p34, %s35, %s36
      %p40 = pneg %p34
      %p41 = scmp.eq.s32.totalorder %s25, 1
      %p42 = por %p40, %p41
      %p43 = scmp.ne.s32.totalorder %s35, %s38
      %p44 = scmp.eq.s32.totalorder %s25, 0
      %p45 = por %p43, %p44
      %p46 = scmp.ne.s32.totalorder %s35, %s38
      %p47 = scmp.eq.s32.totalorder %s30, 1
      %p48 = por %p46, %p47
      %p49 = scmp.ne.s32.totalorder %s38, %s39
      %p50 = scmp.eq.s32.totalorder %s30, 0
      %p51 = por %p49, %p50
      %p52 = scmp.ne.s32.totalorder %s38, %s39
      %p53 = scmp.eq.s32.totalorder %s31, 1
      %p54 = por %p52, %p53
      %p56 = scmp.ne.s32.totalorder %s39, %s55
      %p57 = scmp.eq.s32.totalorder %s31, 0
      %p58 = por %p56, %p57
      %s59 = ssub.s32 %s25, %s32
      %p60 = scmp.eq.s32.totalorder %s59, 0
      %s62 = sadd.s32 %s61, 1
      %s63 = scalar_select %p60, %s61, %s62
      %p66 = pneg %p60
      %p67 = scmp.eq.s32.totalorder %s25, 1
      %p68 = por %p66, %p67
      %p69 = scmp.ne.s32.totalorder %s61, %s64
      %p70 = scmp.eq.s32.totalorder %s25, 0
      %p71 = por %p69, %p70
      %p72 = scmp.ne.s32.totalorder %s61, %s64
      %p73 = scmp.eq.s32.totalorder %s30, 1
      %p74 = por %p72, %p73
      %p75 = scmp.ne.s32.totalorder %s64, %s65
      %p76 = scmp.eq.s32.totalorder %s30, 0
      %p77 = por %p75, %p76
      %p78 = scmp.ne.s32.totalorder %s64, %s65
      %p79 = scmp.eq.s32.totalorder %s31, 1
      %p80 = por %p78, %p79
      %p82 = scmp.ne.s32.totalorder %s65, %s81
      %p83 = scmp.eq.s32.totalorder %s31, 0
      %p84 = por %p82, %p83
      %s85 = ssub.s32 %s25, %s32
      %p86 = scmp.eq.s32.totalorder %s85, 0
      %s88 = sadd.s32 %s87, 1
      %s89 = scalar_select %p86, %s87, %s88
      %p92 = pneg %p86
      %p93 = scmp.eq.s32.totalorder %s25, 1
      %p94 = por %p92, %p93
      %p95 = scmp.ne.s32.totalorder %s87, %s90
      %p96 = scmp.eq.s32.totalorder %s25, 0
      %p97 = por %p95, %p96
      %p98 = scmp.ne.s32.totalorder %s87, %s90
      %p99 = scmp.eq.s32.totalorder %s30, 1
      %p100 = por %p98, %p99
      %p101 = scmp.ne.s32.totalorder %s90, %s91
      %p102 = scmp.eq.s32.totalorder %s30, 0
      %p103 = por %p101, %p102
      %p104 = scmp.ne.s32.totalorder %s90, %s91
      %p105 = scmp.eq.s32.totalorder %s31, 1
      %p106 = por %p104, %p105
      %p108 = scmp.ne.s32.totalorder %s91, %s107
      %p109 = scmp.eq.s32.totalorder %s31, 0
      %p110 = por %p108, %p109
      %s111 = ssub.s32 %s25, %s32
      %p112 = scmp.eq.s32.totalorder %s111, 0
      %s114 = sadd.s32 %s113, 1
      %s115 = scalar_select %p112, %s113, %s114
      %p118 = pneg %p112
      %p119 = scmp.eq.s32.totalorder %s25, 1
      %p120 = por %p118, %p119
      %p121 = scmp.ne.s32.totalorder %s113, %s116
      %p122 = scmp.eq.s32.totalorder %s25, 0
      %p123 = por %p121, %p122
      %p124 = scmp.ne.s32.totalorder %s113, %s116
      %p125 = scmp.eq.s32.totalorder %s30, 1
      %p126 = por %p124, %p125
      %p127 = scmp.ne.s32.totalorder %s116, %s117
      %p128 = scmp.eq.s32.totalorder %s30, 0
      %p129 = por %p127, %p128
      %p130 = scmp.ne.s32.totalorder %s116, %s117
      %p131 = scmp.eq.s32.totalorder %s31, 1
      %p132 = por %p130, %p131
      %p134 = scmp.ne.s32.totalorder %s117, %s133
      %p135 = scmp.eq.s32.totalorder %s31, 0
      %p136 = por %p134, %p135
      %s137 = ssub.s32 %s25, %s32
      %p138 = scmp.eq.s32.totalorder %s137, 0
      %s140 = sadd.s32 %s139, 1
      %s141 = scalar_select %p138, %s139, %s140
      %p144 = pneg %p138
      %p145 = scmp.eq.s32.totalorder %s25, 1
      %p146 = por %p144, %p145
      %p147 = scmp.ne.s32.totalorder %s139, %s142
      %p148 = scmp.eq.s32.totalorder %s25, 0
      %p149 = por %p147, %p148
      %p150 = scmp.ne.s32.totalorder %s139, %s142
      %p151 = scmp.eq.s32.totalorder %s30, 1
      %p152 = por %p150, %p151
      %p153 = scmp.ne.s32.totalorder %s142, %s143
      %p154 = scmp.eq.s32.totalorder %s30, 0
      %p155 = por %p153, %p154
      %p156 = scmp.ne.s32.totalorder %s142, %s143
      %p157 = scmp.eq.s32.totalorder %s31, 1
      %p158 = por %p156, %p157
      %p160 = scmp.ne.s32.totalorder %s143, %s159
      %p161 = scmp.eq.s32.totalorder %s31, 0
      %p162 = por %p160, %p161
      %s163 = ssub.s32 %s25, %s32
      %p164 = scmp.eq.s32.totalorder %s163, 0
      %s166 = sadd.s32 %s165, 1
      %s167 = scalar_select %p164, %s165, %s166
      %p170 = pneg %p164
      %p171 = scmp.eq.s32.totalorder %s25, 1
      %p172 = por %p170, %p171
      %p173 = scmp.ne.s32.totalorder %s165, %s168
      %p174 = scmp.eq.s32.totalorder %s25, 0
      %p175 = por %p173, %p174
      %p176 = scmp.ne.s32.totalorder %s165, %s168
      %p177 = scmp.eq.s32.totalorder %s30, 1
      %p178 = por %p176, %p177
      %p179 = scmp.ne.s32.totalorder %s168, %s169
      %p180 = scmp.eq.s32.totalorder %s30, 0
      %p181 = por %p179, %p180
      %p182 = scmp.ne.s32.totalorder %s168, %s169
      %p183 = scmp.eq.s32.totalorder %s31, 1
      %p184 = por %p182, %p183
      %p186 = scmp.ne.s32.totalorder %s169, %s185
      %p187 = scmp.eq.s32.totalorder %s31, 0
      %p188 = por %p186, %p187
      %s189 = ssub.s32 %s25, %s32
      %p190 = scmp.eq.s32.totalorder %s189, 0
      %s192 = sadd.s32 %s191, 1
      %s193 = scalar_select %p190, %s191, %s192
      %p196 = pneg %p190
      %p197 = scmp.eq.s32.totalorder %s25, 1
      %p198 = por %p196, %p197
      %p199 = scmp.ne.s32.totalorder %s191, %s194
      %p200 = scmp.eq.s32.totalorder %s25, 0
      %p201 = por %p199, %p200
      %p202 = scmp.ne.s32.totalorder %s191, %s194
      %p203 = scmp.eq.s32.totalorder %s30, 1
      %p204 = por %p202, %p203
      %p205 = scmp.ne.s32.totalorder %s194, %s195
      %p206 = scmp.eq.s32.totalorder %s30, 0
      %p207 = por %p205, %p206
      %p208 = scmp.ne.s32.totalorder %s194, %s195
      %p209 = scmp.eq.s32.totalorder %s31, 1
      %p210 = por %p208, %p209
      %p212 = scmp.ne.s32.totalorder %s195, %s211
      %p213 = scmp.eq.s32.totalorder %s31, 0
      %p214 = por %p212, %p213
      %p215 = scmp.le.s32.totalorder 1, %s25
      %p216 = scmp.lt.s32.totalorder %s25, 3
      %p217 = pnand %p215, %p216
      %p218 = pneg %p217
      // Predicated region
      $region9: #{_fused_forward.1} parent=5 // pred_check
        _
      $region10: #{_fused_forward.1} parent=5 // pred_check_branch
        %220 = sbr.rel (%p217) target = $region12
      $region11: #{_fused_forward.1} parent=5 // pred_region
        %s221 = ssub.s32 %s25, 1
      $region12: #{_fused_forward.1} parent=5 // pred_fallthru
        _
      %p222 = scmp.lt.s32.totalorder %s25, 2
      // Predicated region
      $region13: #{_fused_forward.1} parent=5 // pred_check
        %p223 = pneg %p222
      $region14: #{_fused_forward.1} parent=5 // pred_check_branch
        %225 = sbr.rel (%p223) target = $region16
      $region15: #{_fused_forward.1} parent=5 // pred_region
        // Predicated region
        $region17: #{_fused_forward.1} parent=15 // pred_check
          %p226 = pneg %p45
        $region18: #{_fused_forward.1} parent=15 // pred_check_branch
          %228 = sbr.rel (%p226) target = $region20
        $region19: #{_fused_forward.1} parent=15 // pred_region
          %s229 = sand.u32 %s35, 1
          %s230 = scalar_lea.sflag [#allocation3], %s229
          %s231 = sand.u32 %s35, 1
          %s232 = smul.addr %s231, 4
          %s233 = scalar_lea.vmem [#allocation2], %s232
          %s235 = ssub.s32 64, 64
          %236 = vsyncadd %s230, %s235
          %s237 = smul.addr %s25, 64
          %s238 = scalar_lea.hbm %s0, %s237
          %s240 = sshll.u32 %s233, 4
          %s241 = int_to_ptr.vmem [resolvable:$true] %s240
          %243 = dma.hbm_to_vmem [thread:$0]  %s238, 64, %s241, %s230
        $region20: #{_fused_forward.1} parent=15 // pred_fallthru
          _
        // Predicated region
        $region21: #{_fused_forward.1} parent=15 // pred_check
          %p244 = pneg %p71
        $region22: #{_fused_forward.1} parent=15 // pred_check_branch
          %246 = sbr.rel (%p244) target = $region24
        $region23: #{_fused_forward.1} parent=15 // pred_region
          %p247 = scmp.lt.s32.totalorder %s25, 1
          %s248 = scalar_select %p247, %s25, 1
          %s249 = scalar_lea.vmem %s1, %s248
        $region24: #{_fused_forward.1} parent=15 // pred_fallthru
          _
        // Predicated region
        $region25: #{_fused_forward.1} parent=15 // pred_check
          %p250 = pneg %p97
        $region26: #{_fused_forward.1} parent=15 // pred_check_branch
          %252 = sbr.rel (%p250) target = $region28
        $region27: #{_fused_forward.1} parent=15 // pred_region
          %s253 = sand.u32 %s87, 1
          %s254 = scalar_lea.sflag [#allocation6], %s253
          %s255 = sand.u32 %s87, 1
          %s256 = smul.addr %s255, 4
          %s257 = scalar_lea.vmem [#allocation5], %s256
          %s259 = ssub.s32 64, 64
          %260 = vsyncadd %s254, %s259
          %s261 = smul.addr %s25, 64
          %s262 = scalar_lea.hbm %s2, %s261
          %s264 = sshll.u32 %s257, 4
          %s265 = int_to_ptr.vmem [resolvable:$true] %s264
          %267 = dma.hbm_to_vmem [thread:$0]  %s262, 64, %s265, %s254
        $region28: #{_fused_forward.1} parent=15 // pred_fallthru
          _
        // Predicated region
        $region29: #{_fused_forward.1} parent=15 // pred_check
          %p268 = pneg %p123
        $region30: #{_fused_forward.1} parent=15 // pred_check_branch
          %270 = sbr.rel (%p268) target = $region32
        $region31: #{_fused_forward.1} parent=15 // pred_region
          %p271 = scmp.lt.s32.totalorder %s25, 1
          %s272 = scalar_select %p271, %s25, 1
          %s273 = scalar_lea.vmem %s3, %s272
        $region32: #{_fused_forward.1} parent=15 // pred_fallthru
          _
      $region16: #{_fused_forward.1} parent=5 // pred_fallthru
        _
      %p274 = scmp.le.s32.totalorder 1, %s25
      %p275 = scmp.lt.s32.totalorder %s25, 3
      %p276 = pnand %p274, %p275
      %p277 = pneg %p276
      // Predicated region
      $region33: #{_fused_forward.1} parent=5 // pred_check
        _
      $region34: #{_fused_forward.1} parent=5 // pred_check_branch
        %279 = sbr.rel (%p276) target = $region36
      $region35: #{_fused_forward.1} parent=5 // pred_region
        %s280 = ssub.s32 %s25, 1
        %s281 = sand.u32 %s38, 1
        %s282 = scalar_lea.sflag [#allocation3], %s281
        %s283 = sand.u32 %s38, 1
        %s284 = smul.addr %s283, 4
        %s285 = scalar_lea.vmem [#allocation2], %s284
        // Predicated region
        $region37: #{_fused_forward.1} parent=35 // pred_check
          %p286 = pneg %p51
        $region38: #{_fused_forward.1} parent=35 // pred_check_branch
          %288 = sbr.rel (%p286) target = $region40
        $region39: #{_fused_forward.1} parent=35 // pred_region
          %289 = dma.done %s282, 64
        $region40: #{_fused_forward.1} parent=35 // pred_fallthru
          _
        %s290 = sand.u32 %s90, 1
        %s291 = scalar_lea.sflag [#allocation6], %s290
        %s292 = sand.u32 %s90, 1
        %s293 = smul.addr %s292, 4
        %s294 = scalar_lea.vmem [#allocation5], %s293
        // Predicated region
        $region41: #{_fused_forward.1} parent=35 // pred_check
          %p295 = pneg %p103
        $region42: #{_fused_forward.1} parent=35 // pred_check_branch
          %297 = sbr.rel (%p295) target = $region44
        $region43: #{_fused_forward.1} parent=35 // pred_region
          %298 = dma.done %s291, 64
        $region44: #{_fused_forward.1} parent=35 // pred_fallthru
          _
        %s299 = sand.u32 %s38, 1
        %s300 = scalar_lea.sflag [#allocation3], %s299
        %s301 = sand.u32 %s38, 1
        %s302 = smul.addr %s301, 4
        %s303 = scalar_lea.vmem [#allocation2], %s302
        %p304 = pneg %p51
        %p305 = pneg %p48
        %p306 = scmp.lt.s32.totalorder %s30, 1
        %s307 = scalar_select %p306, %s30, 1
        %s308 = scalar_lea.vmem %s1, %s307
        %p309 = pneg %p77
        %p310 = pneg %p74
        %s311 = sand.u32 %s90, 1
        %s312 = scalar_lea.sflag [#allocation6], %s311
        %s313 = sand.u32 %s90, 1
        %s314 = smul.addr %s313, 4
        %s315 = scalar_lea.vmem [#allocation5], %s314
        %p316 = pneg %p103
        %p317 = pneg %p100
        %p318 = scmp.lt.s32.totalorder %s30, 1
        %s319 = scalar_select %p318, %s30, 1
        %s320 = scalar_lea.vmem %s3, %s319
        %p321 = pneg %p129
        %p322 = pneg %p126
        %p323 = pneg %p155
        %p324 = pneg %p152
        %s325 = sand.u32 %s142, 1
        %s326 = scalar_lea.sflag [#allocation4], %s325
        %s327 = sand.u32 %s142, 1
        %s328 = scalar_lea.vmem [#allocation7], %s327
        %p329 = pneg %p181
        %p330 = pneg %p178
        %s331 = sand.u32 %s168, 1
        %s332 = scalar_lea.sflag [#allocation9], %s331
        %s333 = sand.u32 %s168, 1
        %s334 = smul.addr %s333, 128
        %s335 = scalar_lea.vmem [#allocation8], %s334
        %p336 = pneg %p207
        %p337 = pneg %p204
        %p338 = scmp.lt.s32.totalorder %s30, 1
        %s339 = scalar_select %p338, %s30, 1
        %s340 = scalar_lea.vmem %s6, %s339
        %p341 = scmp.lt.s32.totalorder %s30, 1
        %s342 = scalar_select %p341, %s30, 1
        %s343 = scalar_lea.vmem %s1, %s342
        %p344 = scmp.lt.s32.totalorder %s30, 1
        %s345 = scalar_select %p344, %s30, 1
        %s346 = scalar_lea.vmem %s3, %s345
        %p347 = scmp.lt.s32.totalorder %s30, 1
        %s348 = scalar_select %p347, %s30, 1
        %s349 = scalar_lea.vmem %s6, %s348
        %v350 = vld [vmem:[%s285] sm:$0xf]
        %v351 = vld [vmem:[%s343] sm:$0x1]
        %v352 = vld [vmem:[%s294] sm:$0xf]
        %v353 = vld [vmem:[%s346] sm:$0x1]
        %v354 = vsub.f32 1.0, %v351
        %v356 = vlaneseq
        %v357 = vshrl.u32 %v356, 7
        %v358 = vsub.s32 0, %v357
        %v359 = vrot.slane %v354, %v358
        %v361 = vmul.f32 %v350, %v359
        %v362 = vadd.f32 %v361, 1e-20
        %v363 = vlog2.pop %v362
        %v364 = vmul.f32 %v363, 0.6931472
        %v365 = vsub.f32 %v364, -8.0
        %v366 = vrcp.pop 2.5
        %v367 = vmul.f32 %v365, %v366
        %368 = vst [vmem:[%s328 - $0x3] sm:$0x8] %v367
        %v369 = vlaneseq
        %v370 = vshrl.u32 %v369, 7
        %vm371 = vcmp.eq.s32.totalorder %v370, 3
        %v372 = vlaneseq
        %v373 = vshrl.u32 %v372, 7
        %v374 = vsub.s32 3, %v373
        %v375 = vrot.slane %v367, %v374
        %v376 = vsel %vm371, %v375, %v350
        %377 = vxpose.xlu0.b32.start [1/16] %v376, 128
        %378 = vxpose.xlu0.b32.cont [2/16] 0.0, 128
        %379 = vxpose.xlu0.b32.cont [3/16] 0.0, 128
        %380 = vxpose.xlu0.b32.cont [4/16] 0.0, 128
        %381 = vxpose.xlu0.b32.cont [5/16] 0.0, 128
        %382 = vxpose.xlu0.b32.cont [6/16] 0.0, 128
        %383 = vxpose.xlu0.b32.cont [7/16] 0.0, 128
        %384 = vxpose.xlu0.b32.cont [8/16] 0.0, 128
        %385 = vxpose.xlu0.b32.cont [9/16] 0.0, 128
        %386 = vxpose.xlu0.b32.cont [10/16] 0.0, 128
        %387 = vxpose.xlu0.b32.cont [11/16] 0.0, 128
        %388 = vxpose.xlu0.b32.cont [12/16] 0.0, 128
        %389 = vxpose.xlu0.b32.cont [13/16] 0.0, 128
        %390 = vxpose.xlu0.b32.cont [14/16] 0.0, 128
        %391 = vxpose.xlu0.b32.cont [15/16] 0.0, 128
        %392 = vxpose.xlu0.b32.end [16/16] 0.0, 128
        %v393 = vpop.trf.xlu0
        %v394 = vpop.trf.xlu0
        %v395 = vpop.trf.xlu0
        %v396 = vpop.trf.xlu0
        %v397 = vpop.trf.xlu0
        %v398 = vpop.trf.xlu0
        %v399 = vpop.trf.xlu0
        %v400 = vpop.trf.xlu0
        %v401 = vpop.trf.xlu0
        %v402 = vpop.trf.xlu0
        %v403 = vpop.trf.xlu0
        %v404 = vpop.trf.xlu0
        %v405 = vpop.trf.xlu0
        %v406 = vpop.trf.xlu0
        %v407 = vpop.trf.xlu0
        %v408 = vpop.trf.xlu0
        %vm409 = vcmask 31744
        %v411 = vsel %vm409, %v393, 0
        %v414 = vsel %vm409, %v394, 0
        %v417 = vsel %vm409, %v395, 0
        %v420 = vsel %vm409, %v396, 0
        %v423 = vsel %vm409, %v397, 0
        %v426 = vsel %vm409, %v398, 0
        %v429 = vsel %vm409, %v399, 0
        %v432 = vsel %vm409, %v400, 0
        %v435 = vsel %vm409, %v401, 0
        %v438 = vsel %vm409, %v402, 0
        %v441 = vsel %vm409, %v403, 0
        %v444 = vsel %vm409, %v404, 0
        %v447 = vsel %vm409, %v405, 0
        %v450 = vsel %vm409, %v406, 0
        %v453 = vsel %vm409, %v407, 0
        %v456 = vsel %vm409, %v408, 0
        %vm458 = vcmask 1043456
        %v460 = vsel %vm458, %v352, 0
        %462 = vmatprep.subr.mxu0 0.0
        %463 = vmatpush1.msra.mxu0 0.0
        %464 = vmatprep.subr.mxu0 0.0
        %465 = vmatpush1.msra.mxu0 0.0
        %466 = vmatprep.subr.mxu0 0.0
        %467 = vmatpush1.msra.mxu0 0.0
        %468 = vmatprep.subr.mxu0 0.0
        %469 = vmatpush1.msra.mxu0 0.0
        %470 = vmatprep.subr.mxu0 0.0
        %471 = vmatpush1.msra.mxu0 0.0
        %472 = vmatprep.subr.mxu0 0.0
        %473 = vmatpush1.msra.mxu0 0.0
        %474 = vmatprep.subr.mxu0 0.0
        %475 = vmatpush1.msra.mxu0 0.0
        %476 = vmatprep.subr.mxu0 0.0
        %477 = vmatpush1.msra.mxu0 0.0
        %478 = vmatprep.subr.mxu0 0.0
        %479 = vmatpush1.msra.mxu0 0.0
        %480 = vmatprep.subr.mxu0 0.0
        %481 = vmatpush1.msra.mxu0 0.0
        %482 = vmatprep.subr.mxu0 0.0
        %483 = vmatpush1.msra.mxu0 0.0
        %484 = vmatprep.subr.mxu0 0.0
        %485 = vmatpush1.msra.mxu0 0.0
        %486 = vmatprep.subr.mxu0 0.0
        %487 = vmatpush1.msra.mxu0 0.0
        %488 = vmatprep.subr.mxu0 0.0
        %489 = vmatpush1.msra.mxu0 0.0
        %490 = vmatprep.subr.mxu0 0.0
        %491 = vmatpush1.msra.mxu0 0.0
        %492 = vmatprep.subr.mxu0 0.0
        %493 = vmatpush1.msra.mxu0 %v460
        %494 = vmatprep.subr.mxu0 0.0
        %495 = vmatpush2.msra.mxu0 0.0
        %496 = vmatprep.subr.mxu0 0.0
        %497 = vmatpush2.msra.mxu0 0.0
        %498 = vmatprep.subr.mxu0 0.0
        %499 = vmatpush2.msra.mxu0 0.0
        %500 = vmatprep.subr.mxu0 0.0
        %501 = vmatpush2.msra.mxu0 0.0
        %502 = vmatprep.subr.mxu0 0.0
        %503 = vmatpush2.msra.mxu0 0.0
        %504 = vmatprep.subr.mxu0 0.0
        %505 = vmatpush2.msra.mxu0 0.0
        %506 = vmatprep.subr.mxu0 0.0
        %507 = vmatpush2.msra.mxu0 0.0
        %508 = vmatprep.subr.mxu0 0.0
        %509 = vmatpush2.msra.mxu0 0.0
        %510 = vmatprep.subr.mxu0 0.0
        %511 = vmatpush2.msra.mxu0 0.0
        %512 = vmatprep.subr.mxu0 0.0
        %513 = vmatpush2.msra.mxu0 0.0
        %514 = vmatprep.subr.mxu0 0.0
        %515 = vmatpush2.msra.mxu0 0.0
        %516 = vmatprep.subr.mxu0 0.0
        %517 = vmatpush2.msra.mxu0 0.0
        %518 = vmatprep.subr.mxu0 0.0
        %519 = vmatpush2.msra.mxu0 0.0
        %520 = vmatprep.subr.mxu0 0.0
        %521 = vmatpush2.msra.mxu0 0.0
        %522 = vmatprep.subr.mxu0 0.0
        %523 = vmatpush2.msra.mxu0 0.0
        %524 = vmatprep.subr.mxu0 0.0
        %525 = vmatpush2.msra.mxu0 0.0
        %526 = vmatprep.mubr.f32.mxu0 0.0
        %527 = vmatmul.mubr.f32.gmra.mxu0 %v411
        %v528 = vpop.f32.mrf.mxu0
        %v529 = vadd.f32 0.0, %v528
        %v530 = vpop.f32.mrf.mxu0
        %531 = vmatprep.mubr.f32.mxu0 0.0
        %532 = vmatmul.mubr.f32.gmra.mxu0 %v414
        %v533 = vpop.f32.mrf.mxu0
        %v534 = vadd.f32 0.0, %v533
        %v535 = vpop.f32.mrf.mxu0
        %536 = vmatprep.mubr.f32.mxu0 0.0
        %537 = vmatmul.mubr.f32.gmra.mxu0 %v417
        %v538 = vpop.f32.mrf.mxu0
        %v539 = vadd.f32 0.0, %v538
        %v540 = vpop.f32.mrf.mxu0
        %541 = vmatprep.mubr.f32.mxu0 0.0
        %542 = vmatmul.mubr.f32.gmra.mxu0 %v420
        %v543 = vpop.f32.mrf.mxu0
        %v544 = vadd.f32 0.0, %v543
        %v545 = vpop.f32.mrf.mxu0
        %546 = vmatprep.mubr.f32.mxu0 0.0
        %547 = vmatmul.mubr.f32.gmra.mxu0 %v423
        %v548 = vpop.f32.mrf.mxu0
        %v549 = vadd.f32 0.0, %v548
        %v550 = vpop.f32.mrf.mxu0
        %551 = vmatprep.mubr.f32.mxu0 0.0
        %552 = vmatmul.mubr.f32.gmra.mxu0 %v426
        %v553 = vpop.f32.mrf.mxu0
        %v554 = vadd.f32 0.0, %v553
        %v555 = vpop.f32.mrf.mxu0
        %556 = vmatprep.mubr.f32.mxu0 0.0
        %557 = vmatmul.mubr.f32.gmra.mxu0 %v429
        %v558 = vpop.f32.mrf.mxu0
        %v559 = vadd.f32 0.0, %v558
        %v560 = vpop.f32.mrf.mxu0
        %561 = vmatprep.mubr.f32.mxu0 0.0
        %562 = vmatmul.mubr.f32.gmra.mxu0 %v432
        %v563 = vpop.f32.mrf.mxu0
        %v564 = vadd.f32 0.0, %v563
        %v565 = vpop.f32.mrf.mxu0
        %566 = vmatprep.mubr.f32.mxu0 0.0
        %567 = vmatmul.mubr.f32.gmra.mxu0 %v435
        %v568 = vpop.f32.mrf.mxu0
        %v569 = vadd.f32 0.0, %v568
        %v570 = vpop.f32.mrf.mxu0
        %571 = vmatprep.mubr.f32.mxu0 0.0
        %572 = vmatmul.mubr.f32.gmra.mxu0 %v438
        %v573 = vpop.f32.mrf.mxu0
        %v574 = vadd.f32 0.0, %v573
        %v575 = vpop.f32.mrf.mxu0
        %576 = vmatprep.mubr.f32.mxu0 0.0
        %577 = vmatmul.mubr.f32.gmra.mxu0 %v441
        %v578 = vpop.f32.mrf.mxu0
        %v579 = vadd.f32 0.0, %v578
        %v580 = vpop.f32.mrf.mxu0
        %581 = vmatprep.mubr.f32.mxu0 0.0
        %582 = vmatmul.mubr.f32.gmra.mxu0 %v444
        %v583 = vpop.f32.mrf.mxu0
        %v584 = vadd.f32 0.0, %v583
        %v585 = vpop.f32.mrf.mxu0
        %586 = vmatprep.mubr.f32.mxu0 0.0
        %587 = vmatmul.mubr.f32.gmra.mxu0 %v447
        %v588 = vpop.f32.mrf.mxu0
        %v589 = vadd.f32 0.0, %v588
        %v590 = vpop.f32.mrf.mxu0
        %591 = vmatprep.mubr.f32.mxu0 0.0
        %592 = vmatmul.mubr.f32.gmra.mxu0 %v450
        %v593 = vpop.f32.mrf.mxu0
        %v594 = vadd.f32 0.0, %v593
        %v595 = vpop.f32.mrf.mxu0
        %596 = vmatprep.mubr.f32.mxu0 0.0
        %597 = vmatmul.mubr.f32.gmra.mxu0 %v453
        %v598 = vpop.f32.mrf.mxu0
        %v599 = vadd.f32 0.0, %v598
        %v600 = vpop.f32.mrf.mxu0
        %601 = vmatprep.mubr.f32.mxu0 0.0
        %602 = vmatmul.mubr.f32.gmra.mxu0 %v456
        %v603 = vpop.f32.mrf.mxu0
        %v604 = vadd.f32 0.0, %v603
        %v605 = vpop.f32.mrf.mxu0
        %606 = vdwg.mxu0
        %v607 = vmul.f32 %v376, %v376
        %v608 = vsel %vm458, %v607, 0.0
        %v609 = vrot.slane %v608, 4
        %v610 = vadd.f32 %v608, %v609
        %v611 = vrot.slane %v610, 2
        %v612 = vadd.f32 %v610, %v611
        %v613 = vrot.slane %v612, 1
        %v614 = vadd.f32 %v612, %v613
        %615 = vxpose.xlu0.b32.start [1/16] %v614, 128
        %616 = vxpose.xlu0.b32.cont [2/16] 0.0, 128
        %617 = vxpose.xlu0.b32.cont [3/16] 0.0, 128
        %618 = vxpose.xlu0.b32.cont [4/16] 0.0, 128
        %619 = vxpose.xlu0.b32.cont [5/16] 0.0, 128
        %620 = vxpose.xlu0.b32.cont [6/16] 0.0, 128
        %621 = vxpose.xlu0.b32.cont [7/16] 0.0, 128
        %622 = vxpose.xlu0.b32.cont [8/16] 0.0, 128
        %623 = vxpose.xlu0.b32.cont [9/16] 0.0, 128
        %624 = vxpose.xlu0.b32.cont [10/16] 0.0, 128
        %625 = vxpose.xlu0.b32.cont [11/16] 0.0, 128
        %626 = vxpose.xlu0.b32.cont [12/16] 0.0, 128
        %627 = vxpose.xlu0.b32.cont [13/16] 0.0, 128
        %628 = vxpose.xlu0.b32.cont [14/16] 0.0, 128
        %629 = vxpose.xlu0.b32.cont [15/16] 0.0, 128
        %630 = vxpose.xlu0.b32.end [16/16] 0.0, 128
        %v631 = vpop.trf.xlu0
        %v632 = vpop.trf.xlu0
        %v633 = vpop.trf.xlu0
        %v634 = vpop.trf.xlu0
        %v635 = vpop.trf.xlu0
        %v636 = vpop.trf.xlu0
        %v637 = vpop.trf.xlu0
        %v638 = vpop.trf.xlu0
        %v639 = vpop.trf.xlu0
        %v640 = vpop.trf.xlu0
        %v641 = vpop.trf.xlu0
        %v642 = vpop.trf.xlu0
        %v643 = vpop.trf.xlu0
        %v644 = vpop.trf.xlu0
        %v645 = vpop.trf.xlu0
        %v646 = vpop.trf.xlu0
        %v647 = vmul.f32 %v352, %v352
        %v648 = vsel %vm458, %v647, 0.0
        %v649 = vrot.slane %v648, 4
        %v650 = vadd.f32 %v648, %v649
        %v651 = vrot.slane %v650, 2
        %v652 = vadd.f32 %v650, %v651
        %v653 = vrot.slane %v652, 1
        %v654 = vadd.f32 %v652, %v653
        %656 = vset.pattern.permute.xlu0 0
        %657 = vperm.xlu0 %656, %v631
        %v658 = vpop.permute.xlu0 %657
        %661 = vset.pattern.permute.xlu0 0
        %662 = vperm.xlu0 %661, %v632
        %v663 = vpop.permute.xlu0 %662
        %666 = vset.pattern.permute.xlu0 0
        %667 = vperm.xlu0 %666, %v633
        %v668 = vpop.permute.xlu0 %667
        %671 = vset.pattern.permute.xlu0 0
        %672 = vperm.xlu0 %671, %v634
        %v673 = vpop.permute.xlu0 %672
        %676 = vset.pattern.permute.xlu0 0
        %677 = vperm.xlu0 %676, %v635
        %v678 = vpop.permute.xlu0 %677
        %681 = vset.pattern.permute.xlu0 0
        %682 = vperm.xlu0 %681, %v636
        %v683 = vpop.permute.xlu0 %682
        %686 = vset.pattern.permute.xlu0 0
        %687 = vperm.xlu0 %686, %v637
        %v688 = vpop.permute.xlu0 %687
        %691 = vset.pattern.permute.xlu0 0
        %692 = vperm.xlu0 %691, %v638
        %v693 = vpop.permute.xlu0 %692
        %696 = vset.pattern.permute.xlu0 0
        %697 = vperm.xlu0 %696, %v639
        %v698 = vpop.permute.xlu0 %697
        %701 = vset.pattern.permute.xlu0 0
        %702 = vperm.xlu0 %701, %v640
        %v703 = vpop.permute.xlu0 %702
        %706 = vset.pattern.permute.xlu0 0
        %707 = vperm.xlu0 %706, %v641
        %v708 = vpop.permute.xlu0 %707
        %711 = vset.pattern.permute.xlu0 0
        %712 = vperm.xlu0 %711, %v642
        %v713 = vpop.permute.xlu0 %712
        %716 = vset.pattern.permute.xlu0 0
        %717 = vperm.xlu0 %716, %v643
        %v718 = vpop.permute.xlu0 %717
        %721 = vset.pattern.permute.xlu0 0
        %722 = vperm.xlu0 %721, %v644
        %v723 = vpop.permute.xlu0 %722
        %726 = vset.pattern.permute.xlu0 0
        %727 = vperm.xlu0 %726, %v645
        %v728 = vpop.permute.xlu0 %727
        %731 = vset.pattern.permute.xlu0 0
        %732 = vperm.xlu0 %731, %v646
        %v733 = vpop.permute.xlu0 %732
        %v735 = vadd.f32 %v658, %v654
        %v736 = vadd.f32 %v663, %v654
        %v737 = vadd.f32 %v668, %v654
        %v738 = vadd.f32 %v673, %v654
        %v739 = vadd.f32 %v678, %v654
        %v740 = vadd.f32 %v683, %v654
        %v741 = vadd.f32 %v688, %v654
        %v742 = vadd.f32 %v693, %v654
        %v743 = vadd.f32 %v698, %v654
        %v744 = vadd.f32 %v703, %v654
        %v745 = vadd.f32 %v708, %v654
        %v746 = vadd.f32 %v713, %v654
        %v747 = vadd.f32 %v718, %v654
        %v748 = vadd.f32 %v723, %v654
        %v749 = vadd.f32 %v728, %v654
        %v750 = vadd.f32 %v733, %v654
        %v751 = vmul.f32 %v529, 2.0
        %v752 = vmul.f32 %v534, 2.0
        %v753 = vmul.f32 %v539, 2.0
        %v754 = vmul.f32 %v544, 2.0
        %v755 = vmul.f32 %v549, 2.0
        %v756 = vmul.f32 %v554, 2.0
        %v757 = vmul.f32 %v559, 2.0
        %v758 = vmul.f32 %v564, 2.0
        %v759 = vmul.f32 %v569, 2.0
        %v760 = vmul.f32 %v574, 2.0
        %v761 = vmul.f32 %v579, 2.0
        %v762 = vmul.f32 %v584, 2.0
        %v763 = vmul.f32 %v589, 2.0
        %v764 = vmul.f32 %v594, 2.0
        %v765 = vmul.f32 %v599, 2.0
        %v766 = vmul.f32 %v604, 2.0
        %v767 = vsub.f32 %v735, %v751
        %v768 = vsub.f32 %v736, %v752
        %v769 = vsub.f32 %v737, %v753
        %v770 = vsub.f32 %v738, %v754
        %v771 = vsub.f32 %v739, %v755
        %v772 = vsub.f32 %v740, %v756
        %v773 = vsub.f32 %v741, %v757
        %v774 = vsub.f32 %v742, %v758
        %v775 = vsub.f32 %v743, %v759
        %v776 = vsub.f32 %v744, %v760
        %v777 = vsub.f32 %v745, %v761
        %v778 = vsub.f32 %v746, %v762
        %v779 = vsub.f32 %v747, %v763
        %v780 = vsub.f32 %v748, %v764
        %v781 = vsub.f32 %v749, %v765
        %v782 = vsub.f32 %v750, %v766
        %v783 = vmax.f32 %v767, 0.0
        %v784 = vmax.f32 %v768, 0.0
        %v785 = vmax.f32 %v769, 0.0
        %v786 = vmax.f32 %v770, 0.0
        %v787 = vmax.f32 %v771, 0.0
        %v788 = vmax.f32 %v772, 0.0
        %v789 = vmax.f32 %v773, 0.0
        %v790 = vmax.f32 %v774, 0.0
        %v791 = vmax.f32 %v775, 0.0
        %v792 = vmax.f32 %v776, 0.0
        %v793 = vmax.f32 %v777, 0.0
        %v794 = vmax.f32 %v778, 0.0
        %v795 = vmax.f32 %v779, 0.0
        %v796 = vmax.f32 %v780, 0.0
        %v797 = vmax.f32 %v781, 0.0
        %v798 = vmax.f32 %v782, 0.0
        %v799 = vrsqrt.pop %v783
        %v800 = vmul.f32 %v783, %v799
        %vm801 = vcmp.eq.f32.partialorder %v783, inf
        %v802 = vsel %vm801, %v783, %v800
        %vm803 = vcmp.eq.f32.partialorder %v783, 0.0
        %v804 = vand.u32 %v783, 2147483648
        %v805 = vsel %vm803, %v804, %v802
        %v806 = vrsqrt.pop %v784
        %v807 = vmul.f32 %v784, %v806
        %vm808 = vcmp.eq.f32.partialorder %v784, inf
        %v809 = vsel %vm808, %v784, %v807
        %vm810 = vcmp.eq.f32.partialorder %v784, 0.0
        %v811 = vand.u32 %v784, 2147483648
        %v812 = vsel %vm810, %v811, %v809
        %v813 = vrsqrt.pop %v785
        %v814 = vmul.f32 %v785, %v813
        %vm815 = vcmp.eq.f32.partialorder %v785, inf
        %v816 = vsel %vm815, %v785, %v814
        %vm817 = vcmp.eq.f32.partialorder %v785, 0.0
        %v818 = vand.u32 %v785, 2147483648
        %v819 = vsel %vm817, %v818, %v816
        %v820 = vrsqrt.pop %v786
        %v821 = vmul.f32 %v786, %v820
        %vm822 = vcmp.eq.f32.partialorder %v786, inf
        %v823 = vsel %vm822, %v786, %v821
        %vm824 = vcmp.eq.f32.partialorder %v786, 0.0
        %v825 = vand.u32 %v786, 2147483648
        %v826 = vsel %vm824, %v825, %v823
        %v827 = vrsqrt.pop %v787
        %v828 = vmul.f32 %v787, %v827
        %vm829 = vcmp.eq.f32.partialorder %v787, inf
        %v830 = vsel %vm829, %v787, %v828
        %vm831 = vcmp.eq.f32.partialorder %v787, 0.0
        %v832 = vand.u32 %v787, 2147483648
        %v833 = vsel %vm831, %v832, %v830
        %v834 = vrsqrt.pop %v788
        %v835 = vmul.f32 %v788, %v834
        %vm836 = vcmp.eq.f32.partialorder %v788, inf
        %v837 = vsel %vm836, %v788, %v835
        %vm838 = vcmp.eq.f32.partialorder %v788, 0.0
        %v839 = vand.u32 %v788, 2147483648
        %v840 = vsel %vm838, %v839, %v837
        %v841 = vrsqrt.pop %v789
        %v842 = vmul.f32 %v789, %v841
        %vm843 = vcmp.eq.f32.partialorder %v789, inf
        %v844 = vsel %vm843, %v789, %v842
        %vm845 = vcmp.eq.f32.partialorder %v789, 0.0
        %v846 = vand.u32 %v789, 2147483648
        %v847 = vsel %vm845, %v846, %v844
        %v848 = vrsqrt.pop %v790
        %v849 = vmul.f32 %v790, %v848
        %vm850 = vcmp.eq.f32.partialorder %v790, inf
        %v851 = vsel %vm850, %v790, %v849
        %vm852 = vcmp.eq.f32.partialorder %v790, 0.0
        %v853 = vand.u32 %v790, 2147483648
        %v854 = vsel %vm852, %v853, %v851
        %v855 = vrsqrt.pop %v791
        %v856 = vmul.f32 %v791, %v855
        %vm857 = vcmp.eq.f32.partialorder %v791, inf
        %v858 = vsel %vm857, %v791, %v856
        %vm859 = vcmp.eq.f32.partialorder %v791, 0.0
        %v860 = vand.u32 %v791, 2147483648
        %v861 = vsel %vm859, %v860, %v858
        %v862 = vrsqrt.pop %v792
        %v863 = vmul.f32 %v792, %v862
        %vm864 = vcmp.eq.f32.partialorder %v792, inf
        %v865 = vsel %vm864, %v792, %v863
        %vm866 = vcmp.eq.f32.partialorder %v792, 0.0
        %v867 = vand.u32 %v792, 2147483648
        %v868 = vsel %vm866, %v867, %v865
        %v869 = vrsqrt.pop %v793
        %v870 = vmul.f32 %v793, %v869
        %vm871 = vcmp.eq.f32.partialorder %v793, inf
        %v872 = vsel %vm871, %v793, %v870
        %vm873 = vcmp.eq.f32.partialorder %v793, 0.0
        %v874 = vand.u32 %v793, 2147483648
        %v875 = vsel %vm873, %v874, %v872
        %v876 = vrsqrt.pop %v794
        %v877 = vmul.f32 %v794, %v876
        %vm878 = vcmp.eq.f32.partialorder %v794, inf
        %v879 = vsel %vm878, %v794, %v877
        %vm880 = vcmp.eq.f32.partialorder %v794, 0.0
        %v881 = vand.u32 %v794, 2147483648
        %v882 = vsel %vm880, %v881, %v879
        %v883 = vrsqrt.pop %v795
        %v884 = vmul.f32 %v795, %v883
        %vm885 = vcmp.eq.f32.partialorder %v795, inf
        %v886 = vsel %vm885, %v795, %v884
        %vm887 = vcmp.eq.f32.partialorder %v795, 0.0
        %v888 = vand.u32 %v795, 2147483648
        %v889 = vsel %vm887, %v888, %v886
        %v890 = vrsqrt.pop %v796
        %v891 = vmul.f32 %v796, %v890
        %vm892 = vcmp.eq.f32.partialorder %v796, inf
        %v893 = vsel %vm892, %v796, %v891
        %vm894 = vcmp.eq.f32.partialorder %v796, 0.0
        %v895 = vand.u32 %v796, 2147483648
        %v896 = vsel %vm894, %v895, %v893
        %v897 = vrsqrt.pop %v797
        %v898 = vmul.f32 %v797, %v897
        %vm899 = vcmp.eq.f32.partialorder %v797, inf
        %v900 = vsel %vm899, %v797, %v898
        %vm901 = vcmp.eq.f32.partialorder %v797, 0.0
        %v902 = vand.u32 %v797, 2147483648
        %v903 = vsel %vm901, %v902, %v900
        %v904 = vrsqrt.pop %v798
        %v905 = vmul.f32 %v798, %v904
        %vm906 = vcmp.eq.f32.partialorder %v798, inf
        %v907 = vsel %vm906, %v798, %v905
        %vm908 = vcmp.eq.f32.partialorder %v798, 0.0
        %v909 = vand.u32 %v798, 2147483648
        %v910 = vsel %vm908, %v909, %v907
        %911 = vst [vmem:[%s335] sm:$0xff] %v805
        %912 = vst [vmem:[%s335 + $0x8] sm:$0xff] %v812
        %913 = vst [vmem:[%s335 + $0x10] sm:$0xff] %v819
        %914 = vst [vmem:[%s335 + $0x18] sm:$0xff] %v826
        %915 = vst [vmem:[%s335 + $0x20] sm:$0xff] %v833
        %916 = vst [vmem:[%s335 + $0x28] sm:$0xff] %v840
        %917 = vst [vmem:[%s335 + $0x30] sm:$0xff] %v847
        %918 = vst [vmem:[%s335 + $0x38] sm:$0xff] %v854
        %919 = vst [vmem:[%s335 + $0x40] sm:$0xff] %v861
        %920 = vst [vmem:[%s335 + $0x48] sm:$0xff] %v868
        %921 = vst [vmem:[%s335 + $0x50] sm:$0xff] %v875
        %922 = vst [vmem:[%s335 + $0x58] sm:$0xff] %v882
        %923 = vst [vmem:[%s335 + $0x60] sm:$0xff] %v889
        %924 = vst [vmem:[%s335 + $0x68] sm:$0xff] %v896
        %925 = vst [vmem:[%s335 + $0x70] sm:$0xff] %v903
        %926 = vst [vmem:[%s335 + $0x78] sm:$0xff] %v910
        %v927 = vmul.f32 %v353, %v353
        %v928 = vadd.f32 %v927, 0.25
        %v929 = vrcp.pop %v928
        %v930 = vmul.f32 0.25, %v929
        %v931 = vmul.f32 %v353, 0.5
        %v932 = vrsqrt.pop %v928
        %v933 = vmul.f32 %v931, %v932
        %v934 = vrcp.pop %v933
        %v935 = vmul.f32 1.0, %v934
        %v937 = vlaneseq
        %v938 = vshrl.u32 %v937, 7
        %v939 = vsub.s32 0, %v938
        %v940 = vrot.slane %v353, %v939
        %941 = vset.pattern.permute.xlu0 0
        %942 = vperm.xlu0 %941, %v940
        %v943 = vpop.permute.xlu0 %942
        %v945 = vmul.f32 %v352, %v943
        %v946 = vadd.f32 %v376, %v945
        %v948 = vlaneseq
        %v949 = vshrl.u32 %v948, 7
        %v950 = vsub.s32 0, %v949
        %v951 = vrot.slane %v930, %v950
        %952 = vset.pattern.permute.xlu0 0
        %953 = vperm.xlu0 %952, %v951
        %v954 = vpop.permute.xlu0 %953
        %v956 = vmul.f32 %v954, %v946
        %v957 = vsub.f32 %v376, %v956
        %v959 = vlaneseq
        %v960 = vshrl.u32 %v959, 7
        %v961 = vsub.s32 0, %v960
        %v962 = vrot.slane %v935, %v961
        %963 = vset.pattern.permute.xlu0 0
        %964 = vperm.xlu0 %963, %v962
        %v965 = vpop.permute.xlu0 %964
        %v967 = vmul.f32 %v957, %v965
        %v968 = vmul.f32 %v967, %v967
        %v969 = vmul.f32 %v968, %v359
        %vm970 = vcmask 1040384
        %v971 = vsel %vm970, %v354, 0.0
        %972 = vadd.xlane.f32.xlu0 %v971
        %v973 = vpop.xlane.xlu0 %972
        %v974 = vrot.slane %v973, 4
        %v975 = vadd.f32 %v973, %v974
        %v976 = vrot.slane %v975, 2
        %v977 = vadd.f32 %v975, %v976
        %v978 = vrot.slane %v977, 1
        %v979 = vadd.f32 %v977, %v978
        %v980 = vmax.f32 %v979, 1.0
        %v981 = vmul.f32 %v980, 4.0
        %v982 = vrcp.pop %v981
        %v983 = vmul.f32 1.0, %v982
        %v984 = vsel %vm458, %v969, 0.0
        %985 = vadd.xlane.f32.xlu0 %v984
        %v986 = vpop.xlane.xlu0 %985
        %v987 = vrot.slane %v986, 4
        %v988 = vadd.f32 %v986, %v987
        %v989 = vrot.slane %v988, 2
        %v990 = vadd.f32 %v988, %v989
        %v991 = vrot.slane %v990, 1
        %v992 = vadd.f32 %v990, %v991
        %v993 = vmul.f32 %v992, %v983
        %vm994 = vcmask 0
        %995 = vst.msk [vmem:[%s349] sm:$0x1] %vm994, %v993
        %s996 = sand.u32 %s142, 1
        %s997 = scalar_lea.sflag [#allocation4], %s996
        %s998 = sand.u32 %s142, 1
        %s999 = scalar_lea.vmem [#allocation7], %s998
        %s1000 = sand.u32 %s168, 1
        %s1001 = scalar_lea.sflag [#allocation9], %s1000
        %s1002 = sand.u32 %s168, 1
        %s1003 = smul.addr %s1002, 128
        %s1004 = scalar_lea.vmem [#allocation8], %s1003
        %p1005 = scmp.lt.s32.totalorder %s30, 1
        %s1006 = scalar_select %p1005, %s30, 1
        %s1007 = scalar_lea.vmem %s6, %s1006
        // Predicated region
        $region45: #{_fused_forward.1} parent=35 // pred_check
          %p1008 = pneg %p152
        $region46: #{_fused_forward.1} parent=35 // pred_check_branch
          %1010 = sbr.rel (%p1008) target = $region48
        $region47: #{_fused_forward.1} parent=35 // pred_region
          %s1012 = ssub.s32 16, 16
          %1013 = vsyncadd %s997, %s1012
          %s1014 = smul.addr %s30, 16
          %s1015 = scalar_lea.hbm %s4, %s1014
          %s1017 = sshll.u32 %s999, 4
          %s1018 = int_to_ptr.vmem [resolvable:$true] %s1017
          %1020 = dma.vmem_to_hbm [thread:$0]  %s1018, 16, %s1015, %s997
        $region48: #{_fused_forward.1} parent=35 // pred_fallthru
          _
        // Predicated region
        $region49: #{_fused_forward.1} parent=35 // pred_check
          %p1021 = pneg %p178
        $region50: #{_fused_forward.1} parent=35 // pred_check_branch
          %1023 = sbr.rel (%p1021) target = $region52
        $region51: #{_fused_forward.1} parent=35 // pred_region
          %s1025 = ssub.s32 2048, 2048
          %1026 = vsyncadd %s1001, %s1025
          %s1027 = smul.addr %s30, 16
          %s1028 = smul.addr %s1027, 128
          %s1029 = scalar_lea.hbm %s5, %s1028
          %s1030 = sshll.u32 %s1004, 4
          %s1031 = int_to_ptr.vmem [resolvable:$true] %s1030
          %1036 = dma.vmem_to_hbm [thread:$0]  %s1031, 2048, %s1029, %s1001, 128, 128, 8
        $region52: #{_fused_forward.1} parent=35 // pred_fallthru
          _
        // Predicated region
        $region53: #{_fused_forward.1} parent=35 // pred_check
          %p1037 = pneg %p204
        $region54: #{_fused_forward.1} parent=35 // pred_check_branch
          %1039 = sbr.rel (%p1037) target = $region56
        $region55: #{_fused_forward.1} parent=35 // pred_region
          _
        $region56: #{_fused_forward.1} parent=35 // pred_fallthru
          _
      $region36: #{_fused_forward.1} parent=5 // pred_fallthru
        _
      %p1040 = scmp.le.s32.totalorder 2, %s25
      // Predicated region
      $region57: #{_fused_forward.1} parent=5 // pred_check
        %p1041 = pneg %p1040
      $region58: #{_fused_forward.1} parent=5 // pred_check_branch
        %1043 = sbr.rel (%p1041) target = $region60
      $region59: #{_fused_forward.1} parent=5 // pred_region
        %s1044 = ssub.s32 %s25, 2
        // Predicated region
        $region61: #{_fused_forward.1} parent=59 // pred_check
          %p1045 = pneg %p158
        $region62: #{_fused_forward.1} parent=59 // pred_check_branch
          %1047 = sbr.rel (%p1045) target = $region64
        $region63: #{_fused_forward.1} parent=59 // pred_region
          %s1048 = sand.u32 %s143, 1
          %s1049 = scalar_lea.sflag [#allocation4], %s1048
          %s1050 = sand.u32 %s143, 1
          %s1051 = scalar_lea.vmem [#allocation7], %s1050
          %1052 = dma.done %s1049, 16
        $region64: #{_fused_forward.1} parent=59 // pred_fallthru
          _
        // Predicated region
        $region65: #{_fused_forward.1} parent=59 // pred_check
          %p1053 = pneg %p184
        $region66: #{_fused_forward.1} parent=59 // pred_check_branch
          %1055 = sbr.rel (%p1053) target = $region68
        $region67: #{_fused_forward.1} parent=59 // pred_region
          %s1056 = sand.u32 %s169, 1
          %s1057 = scalar_lea.sflag [#allocation9], %s1056
          %s1058 = sand.u32 %s169, 1
          %s1059 = smul.addr %s1058, 128
          %s1060 = scalar_lea.vmem [#allocation8], %s1059
          %1061 = dma.done %s1057, 2048
        $region68: #{_fused_forward.1} parent=59 // pred_fallthru
          _
        // Predicated region
        $region69: #{_fused_forward.1} parent=59 // pred_check
          %p1062 = pneg %p210
        $region70: #{_fused_forward.1} parent=59 // pred_check_branch
          %1064 = sbr.rel (%p1062) target = $region72
        $region71: #{_fused_forward.1} parent=59 // pred_region
          %p1065 = scmp.lt.s32.totalorder %s31, 1
          %s1066 = scalar_select %p1065, %s31, 1
          %s1067 = scalar_lea.vmem %s6, %s1066
        $region72: #{_fused_forward.1} parent=59 // pred_fallthru
          _
      $region60: #{_fused_forward.1} parent=5 // pred_fallthru
        _
    $region6: #{_fused_forward.1} parent=1 // loop_footer
      %s29 = sadd.s32 1, %s25
    $region7: #{_fused_forward.1} parent=1 // loop_footer_branch
      %24 = sbr.rel target = $region3
    $region8: #{_fused_forward.1} parent=1 // loop_exit
      _
    %1068 = vsyncpa [#allocation3], 1
    %s1069 = scalar_lea.sflag [#allocation3], 1
    %1070 = vsyncpa %s1069, 1
    %1071 = vsyncpa [#allocation6], 1
    %s1072 = scalar_lea.sflag [#allocation6], 1
    %1073 = vsyncpa %s1072, 1
    %1074 = vsyncpa [#allocation4], 1
    %s1075 = scalar_lea.sflag [#allocation4], 1
    %1076 = vsyncpa %s1075, 1
    %1077 = vsyncpa [#allocation9], 1
    %s1078 = scalar_lea.sflag [#allocation9], 1
    %1079 = vsyncpa %s1078, 1

</llo_original>
